<compile_context>
chip_gen: v7x
topology: tpu7x:2x2x1
jax: 0.10.0
libtpu: 0.0.40
codegen_flags: <defaults>
</compile_context>

<pallas_src>
import numpy as np
import jax
import jax.numpy as jnp
from jax.experimental import pallas as pl
from jax.experimental.pallas import tpu as pltpu


def _round_up(x, m):
    return (x + m - 1) // m * m


def _pad2d(a, rows, cols):
    return jnp.pad(a, ((0, rows - a.shape[0]), (0, cols - a.shape[1])))


def gcn_kernel(cols_ref, cnt_ref, ahat_ref, x_ref, w1_ref, b1_ref, wfc_ref, bfc_ref,
               out_ref, acc_ref):
    i = pl.program_id(0)          # node-row tile
    k = pl.program_id(1)          # position in this row-tile's nonzero-block list
    nk = pl.num_programs(1)

    @pl.when(k == 0)
    def _init():
        acc_ref[...] = jnp.zeros_like(acc_ref)

    # Aggregation: accumulate only real (non-padded) nonzero Ahat blocks.
    # bf16 operands on the MXU, f32 accumulation in VMEM scratch.
    @pl.when(k < cnt_ref[i])
    def _accumulate():
        acc_ref[...] += jnp.dot(ahat_ref[...], x_ref[...],
                                preferred_element_type=jnp.float32)

    # Epilogue once per output tile: GraphConv weight + bias, ReLU, final Linear.
    @pl.when(k == nk - 1)
    def _finalize():
        h = jnp.dot(acc_ref[...], w1_ref[...],
                    preferred_element_type=jnp.float32) + b1_ref[...]
        h = jnp.maximum(h, 0.0)
        out = jnp.dot(h, wfc_ref[...],
                      preferred_element_type=jnp.float32) + bfc_ref[...]
        out_ref[...] = out.astype(out_ref.dtype)


def _block_schedule(ahat_np, tm, tk):
    """Per row-tile list of Ahat column-block indices containing any nonzero."""
    mt = ahat_np.shape[0] // tm
    kt = ahat_np.shape[1] // tk
    cols, cnts = [], []
    for i in range(mt):
        row = ahat_np[i * tm:(i + 1) * tm]
        nz = [k for k in range(kt) if np.any(row[:, k * tk:(k + 1) * tk] != 0.0)]
        cnts.append(len(nz))
        cols.append(nz if nz else [0])
    kb = max(1, max(cnts))
    cols_arr = np.zeros((mt, kb), np.int32)
    for i, nz in enumerate(cols):
        # Pad with the last valid block index: the pipeline sees an unchanged block
        # index (no re-fetch) and the kernel gates the accumulate off.
        cols_arr[i, :] = nz + [nz[-1]] * (kb - len(nz))
    return jnp.asarray(cols_arr), jnp.asarray(np.array(cnts, np.int32)), kb


def gcn_forward(ahat, x, w1, b1, wfc, bfc, *, tm=128, tk=128):
    n = ahat.shape[0]
    in_feats = x.shape[1]
    hid = w1.shape[1]
    out_feats = wfc.shape[1]

    # Pad node count to the tile sizes, feature dims to 128 lanes (lane-dense).
    np_m = _round_up(n, tm)
    np_k = _round_up(n, tk)
    fin_p = _round_up(in_feats, 128)
    hid_p = _round_up(hid, 128)
    fout_p = _round_up(out_feats, 128)

    ahat_p = _pad2d(ahat.astype(jnp.float32), np_m, np_k)
    cols, cnts, kb = _block_schedule(np.asarray(ahat_p), tm, tk)

    ahat_bf = ahat_p.astype(jnp.bfloat16)                 # dominant O(N^2) operand in bf16
    x_bf = _pad2d(x.astype(jnp.float32), np_k, fin_p).astype(jnp.bfloat16)
    w1_p = _pad2d(w1.astype(jnp.float32), fin_p, hid_p)
    b1_p = _pad2d(b1.astype(jnp.float32).reshape(1, -1), 1, hid_p)
    wfc_p = _pad2d(wfc.astype(jnp.float32), hid_p, fout_p)
    bfc_p = _pad2d(bfc.astype(jnp.float32).reshape(1, -1), 1, fout_p)

    grid = (np_m // tm, kb)

    out_padded = pl.pallas_call(
        gcn_kernel,
        out_shape=jax.ShapeDtypeStruct((np_m, fout_p), jnp.float32),
        grid_spec=pltpu.PrefetchScalarGridSpec(
            num_scalar_prefetch=2,
            grid=grid,
            in_specs=[
                # Ahat row tile; column block chosen by the sparse schedule.
                pl.BlockSpec((tm, tk), lambda i, k, cols, cnt: (i, cols[i, k])),
                # Matching x row block.
                pl.BlockSpec((tk, fin_p), lambda i, k, cols, cnt: (cols[i, k], 0)),
                # Resident weights / biases (same block for every grid step).
                pl.BlockSpec((fin_p, hid_p), lambda i, k, cols, cnt: (0, 0)),
                pl.BlockSpec((1, hid_p), lambda i, k, cols, cnt: (0, 0)),
                pl.BlockSpec((hid_p, fout_p), lambda i, k, cols, cnt: (0, 0)),
                pl.BlockSpec((1, fout_p), lambda i, k, cols, cnt: (0, 0)),
            ],
            out_specs=pl.BlockSpec((tm, fout_p), lambda i, k, cols, cnt: (i, 0)),
            scratch_shapes=[pltpu.VMEM((tm, fin_p), jnp.float32)],
        ),
        compiler_params=pltpu.CompilerParams(
            dimension_semantics=("parallel", "arbitrary"),
            vmem_limit_bytes=32 * 1024 * 1024,
        ),
    )(cols, cnts, ahat_bf, x_bf, w1_p, b1_p, wfc_p, bfc_p)

    # Strip node-row and lane padding.
    return out_padded[:n, :out_feats]


def build_normalized_adjacency(n_nodes, src, dst, edge_weights):
    # Dense weighted adjacency A[dst, src] = w_e
    A = jnp.zeros((n_nodes, n_nodes), jnp.float32).at[dst, src].add(edge_weights)
    # DGL GraphConv norm='both' uses *unweighted* degree counts.
    deg_out = jnp.zeros((n_nodes,), jnp.float32).at[src].add(1.0)
    deg_in = jnp.zeros((n_nodes,), jnp.float32).at[dst].add(1.0)
    norm_src = jnp.power(jnp.clip(deg_out, 1.0, None), -0.5)
    norm_dst = jnp.power(jnp.clip(deg_in, 1.0, None), -0.5)
    return norm_dst[:, None] * A * norm_src[None, :]


if __name__ == "__main__":
    key = jax.random.PRNGKey(0)
    k_x, k_w1, k_wfc, k_bfc, k_ew = jax.random.split(key, 5)

    # Small-but-tiled problem sizes
    N = 300          # number of graph nodes (pads to 3 x 128 row/col tiles)
    in_feats = 16
    hid_feats = [32]
    out_feats = 8

    # Deterministic graph: two disjoint rings (+ self-loops). Some Ahat row-tiles then
    # have all-zero column blocks, which exercises the block-sparse K skipping.
    half = N // 2
    src_list, dst_list = [], []
    for base in (0, half):
        for j in range(half):
            i = base + j
            src_list += [i, i, i]
            dst_list += [i, base + (j + 1) % half, base + (j - 1) % half]
    src = jnp.array(src_list, jnp.int32)
    dst = jnp.array(dst_list, jnp.int32)
    edge_weights = jax.random.uniform(k_ew, (src.shape[0],), jnp.float32, 0.1, 1.0)

    ahat = build_normalized_adjacency(N, src, dst, edge_weights)

    # Node features
    x = jax.random.normal(k_x, (N, in_feats), jnp.float32)

    # GraphConv params: weight (in_feats, hid) xavier-uniform, bias zeros
    bound1 = (6.0 / (in_feats + hid_feats[0])) ** 0.5
    w1 = jax.random.uniform(k_w1, (in_feats, hid_feats[0]), jnp.float32, -bound1, bound1)
    b1 = jnp.zeros((1, hid_feats[0]), jnp.float32)

    # nn.Linear(hid, out): store transposed weight (hid, out) for h @ Wfc
    bound2 = 1.0 / (hid_feats[-1] ** 0.5)
    wfc = jax.random.uniform(k_wfc, (hid_feats[-1], out_feats), jnp.float32, -bound2, bound2)
    bfc = jax.random.uniform(k_bfc, (1, out_feats), jnp.float32, -bound2, bound2)

    out = gcn_forward(ahat, x, w1, b1, wfc, bfc)
    jax.block_until_ready(out)

    # Pure-JAX reference (aggregation operands cast bf16 like the kernel's MXU path).
    ahat_bf = ahat.astype(jnp.bfloat16).astype(jnp.float32)
    x_bf = x.astype(jnp.bfloat16).astype(jnp.float32)
    ref = jnp.maximum(ahat_bf @ x_bf @ w1 + b1, 0.0) @ wfc + bfc

    assert out.shape == (N, out_feats)
    assert jnp.allclose(out, ref, atol=1e-3, rtol=1e-3)

    print("KERNEL_OK")
</pallas_src>

<mosaic_0001>
module attributes {stable_mosaic.version = 11 : i64} {
  func.func @gcn_kernel(%arg0: i32, %arg1: i32, %arg2: memref<3x3xi32, #tpu.memory_space<smem>>, %arg3: memref<3xi32, #tpu.memory_space<smem>>, %arg4: memref<128x128xbf16, #tpu.memory_space<vmem>>, %arg5: memref<128x128xbf16, #tpu.memory_space<vmem>>, %arg6: memref<128x128xf32, #tpu.memory_space<vmem>>, %arg7: memref<1x128xf32, #tpu.memory_space<vmem>>, %arg8: memref<128x128xf32, #tpu.memory_space<vmem>>, %arg9: memref<1x128xf32, #tpu.memory_space<vmem>>, %arg10: memref<128x128xf32, #tpu.memory_space<vmem>>, %arg11: memref<128x128xf32, #tpu.memory_space<vmem>>) attributes {dimension_semantics = [#tpu.dimension_semantics<parallel>, #tpu.dimension_semantics<arbitrary>], iteration_bounds = array<i64: 3, 3>, scalar_prefetch = 2 : i64, scratch_operands = 1 : i64, tpu.core_type = #tpu.core_type<tc>, window_params = [{transform_indices = @transform_0, window_bounds = array<i64: 128, 128>}, {transform_indices = @transform_1, window_bounds = array<i64: 128, 128>}, {pipeline_mode = #tpu.pipeline_mode<synchronous>, transform_indices = @transform_2, window_bounds = array<i64: 128, 128>}, {pipeline_mode = #tpu.pipeline_mode<synchronous>, transform_indices = @transform_3, window_bounds = array<i64: 1, 128>}, {pipeline_mode = #tpu.pipeline_mode<synchronous>, transform_indices = @transform_4, window_bounds = array<i64: 128, 128>}, {pipeline_mode = #tpu.pipeline_mode<synchronous>, transform_indices = @transform_5, window_bounds = array<i64: 1, 128>}, {transform_indices = @transform_6, window_bounds = array<i64: 128, 128>}]} {
    %c0_i32 = arith.constant 0 : i32
    %0 = arith.cmpi eq, %arg1, %c0_i32 : i32
    %1 = arith.extui %0 : i1 to i32
    %c0_i32_0 = arith.constant 0 : i32
    %2 = arith.cmpi ne, %1, %c0_i32_0 : i32
    scf.if %2 {
      %cst = arith.constant 0.000000e+00 : f32
      %11 = vector.broadcast %cst : f32 to vector<128x128xf32>
      %c0 = arith.constant 0 : index
      %c0_3 = arith.constant 0 : index
      %12 = vector.load %arg11[%c0, %c0_3] : memref<128x128xf32, #tpu.memory_space<vmem>>, vector<128x128xf32>
      tpu.vector_store %arg11[%c0, %c0_3], %11 {strides = array<i32>} : memref<128x128xf32, #tpu.memory_space<vmem>>, vector<128x128xf32>,
    } else {
    }
    %3 = arith.index_cast %arg0 : i32 to index
    %4 = memref.load %arg3[%3] : memref<3xi32, #tpu.memory_space<smem>>
    %5 = arith.cmpi slt, %arg1, %4 : i32
    %6 = arith.extui %5 : i1 to i32
    %c0_i32_1 = arith.constant 0 : i32
    %7 = arith.cmpi ne, %6, %c0_i32_1 : i32
    scf.if %7 {
      %c0 = arith.constant 0 : index
      %c0_3 = arith.constant 0 : index
      %11 = vector.load %arg11[%c0, %c0_3] : memref<128x128xf32, #tpu.memory_space<vmem>>, vector<128x128xf32>
      %c0_4 = arith.constant 0 : index
      %c0_5 = arith.constant 0 : index
      %12 = vector.load %arg4[%c0_4, %c0_5] : memref<128x128xbf16, #tpu.memory_space<vmem>>, vector<128x128xbf16>
      %c0_6 = arith.constant 0 : index
      %c0_7 = arith.constant 0 : index
      %13 = vector.load %arg5[%c0_6, %c0_7] : memref<128x128xbf16, #tpu.memory_space<vmem>>, vector<128x128xbf16>
      %cst = arith.constant dense<0.000000e+00> : vector<128x128xf32>
      %14 = tpu.matmul %12, %13, %cst {dimension_numbers = #tpu.dot_dimension_numbers<[1], [0], [0], [1], [0, 0, 1, 1], [], []>} : vector<128x128xbf16>, vector<128x128xbf16>, vector<128x128xf32> -> vector<128x128xf32>
      %15 = arith.addf %11, %14 : vector<128x128xf32>
      %c0_8 = arith.constant 0 : index
      %c0_9 = arith.constant 0 : index
      %16 = vector.load %arg11[%c0_8, %c0_9] : memref<128x128xf32, #tpu.memory_space<vmem>>, vector<128x128xf32>
      tpu.vector_store %arg11[%c0_8, %c0_9], %15 {strides = array<i32>} : memref<128x128xf32, #tpu.memory_space<vmem>>, vector<128x128xf32>,
    } else {
    }
    %c2_i32 = arith.constant 2 : i32
    %8 = arith.cmpi eq, %arg1, %c2_i32 : i32
    %9 = arith.extui %8 : i1 to i32
    %c0_i32_2 = arith.constant 0 : i32
    %10 = arith.cmpi ne, %9, %c0_i32_2 : i32
    scf.if %10 {
      %c0 = arith.constant 0 : index
      %c0_3 = arith.constant 0 : index
      %11 = vector.load %arg11[%c0, %c0_3] : memref<128x128xf32, #tpu.memory_space<vmem>>, vector<128x128xf32>
      %c0_4 = arith.constant 0 : index
      %c0_5 = arith.constant 0 : index
      %12 = vector.load %arg6[%c0_4, %c0_5] : memref<128x128xf32, #tpu.memory_space<vmem>>, vector<128x128xf32>
      %cst = arith.constant dense<0.000000e+00> : vector<128x128xf32>
      %13 = tpu.matmul %11, %12, %cst {dimension_numbers = #tpu.dot_dimension_numbers<[1], [0], [0], [1], [0, 0, 1, 1], [], []>} : vector<128x128xf32>, vector<128x128xf32>, vector<128x128xf32> -> vector<128x128xf32>
      %c0_6 = arith.constant 0 : index
      %c0_7 = arith.constant 0 : index
      %14 = vector.load %arg7[%c0_6, %c0_7] : memref<1x128xf32, #tpu.memory_space<vmem>>, vector<1x128xf32>
      %15 = vector.broadcast %14 : vector<1x128xf32> to vector<128x128xf32>
      %16 = arith.addf %13, %15 : vector<128x128xf32>
      %cst_8 = arith.constant 0.000000e+00 : f32
      %17 = vector.broadcast %cst_8 : f32 to vector<128x128xf32>
      %18 = arith.maximumf %16, %17 : vector<128x128xf32>
      %c0_9 = arith.constant 0 : index
      %c0_10 = arith.constant 0 : index
      %19 = vector.load %arg8[%c0_9, %c0_10] : memref<128x128xf32, #tpu.memory_space<vmem>>, vector<128x128xf32>
      %cst_11 = arith.constant dense<0.000000e+00> : vector<128x128xf32>
      %20 = tpu.matmul %18, %19, %cst_11 {dimension_numbers = #tpu.dot_dimension_numbers<[1], [0], [0], [1], [0, 0, 1, 1], [], []>} : vector<128x128xf32>, vector<128x128xf32>, vector<128x128xf32> -> vector<128x128xf32>
      %c0_12 = arith.constant 0 : index
      %c0_13 = arith.constant 0 : index
      %21 = vector.load %arg9[%c0_12, %c0_13] : memref<1x128xf32, #tpu.memory_space<vmem>>, vector<1x128xf32>
      %22 = vector.broadcast %21 : vector<1x128xf32> to vector<128x128xf32>
      %23 = arith.addf %20, %22 : vector<128x128xf32>
      %c0_14 = arith.constant 0 : index
      %c0_15 = arith.constant 0 : index
      %24 = vector.load %arg10[%c0_14, %c0_15] : memref<128x128xf32, #tpu.memory_space<vmem>>, vector<128x128xf32>
      tpu.vector_store %arg10[%c0_14, %c0_15], %23 {strides = array<i32>} : memref<128x128xf32, #tpu.memory_space<vmem>>, vector<128x128xf32>,
    } else {
    }
    return
  }
  func.func @transform_0(%arg0: i32, %arg1: i32, %arg2: memref<3x3xi32, #tpu.memory_space<smem>>, %arg3: memref<3xi32, #tpu.memory_space<smem>>) -> (i32, i32) {
    %0 = arith.index_cast %arg0 : i32 to index
    %1 = arith.index_cast %arg1 : i32 to index
    %2 = memref.load %arg2[%0, %1] : memref<3x3xi32, #tpu.memory_space<smem>>
    %c0_i32 = arith.constant 0 : i32
    return %arg0, %2 : i32, i32
  }
  func.func @transform_1(%arg0: i32, %arg1: i32, %arg2: memref<3x3xi32, #tpu.memory_space<smem>>, %arg3: memref<3xi32, #tpu.memory_space<smem>>) -> (i32, i32) {
    %0 = arith.index_cast %arg0 : i32 to index
    %1 = arith.index_cast %arg1 : i32 to index
    %2 = memref.load %arg2[%0, %1] : memref<3x3xi32, #tpu.memory_space<smem>>
    %c0_i32 = arith.constant 0 : i32
    %c0_i32_0 = arith.constant 0 : i32
    return %2, %c0_i32 : i32, i32
  }
  func.func @transform_2(%arg0: i32, %arg1: i32, %arg2: memref<3x3xi32, #tpu.memory_space<smem>>, %arg3: memref<3xi32, #tpu.memory_space<smem>>) -> (i32, i32) {
    %c0_i32 = arith.constant 0 : i32
    %c0_i32_0 = arith.constant 0 : i32
    %c0_i32_1 = arith.constant 0 : i32
    return %c0_i32, %c0_i32_0 : i32, i32
  }
  func.func @transform_3(%arg0: i32, %arg1: i32, %arg2: memref<3x3xi32, #tpu.memory_space<smem>>, %arg3: memref<3xi32, #tpu.memory_space<smem>>) -> (i32, i32) {
    %c0_i32 = arith.constant 0 : i32
    %c0_i32_0 = arith.constant 0 : i32
    %c0_i32_1 = arith.constant 0 : i32
    return %c0_i32, %c0_i32_0 : i32, i32
  }
  func.func @transform_4(%arg0: i32, %arg1: i32, %arg2: memref<3x3xi32, #tpu.memory_space<smem>>, %arg3: memref<3xi32, #tpu.memory_space<smem>>) -> (i32, i32) {
    %c0_i32 = arith.constant 0 : i32
    %c0_i32_0 = arith.constant 0 : i32
    %c0_i32_1 = arith.constant 0 : i32
    return %c0_i32, %c0_i32_0 : i32, i32
  }
  func.func @transform_5(%arg0: i32, %arg1: i32, %arg2: memref<3x3xi32, #tpu.memory_space<smem>>, %arg3: memref<3xi32, #tpu.memory_space<smem>>) -> (i32, i32) {
    %c0_i32 = arith.constant 0 : i32
    %c0_i32_0 = arith.constant 0 : i32
    %c0_i32_1 = arith.constant 0 : i32
    return %c0_i32, %c0_i32_0 : i32, i32
  }
  func.func @transform_6(%arg0: i32, %arg1: i32, %arg2: memref<3x3xi32, #tpu.memory_space<smem>>, %arg3: memref<3xi32, #tpu.memory_space<smem>>) -> (i32, i32) {
    %c0_i32 = arith.constant 0 : i32
    %c0_i32_0 = arith.constant 0 : i32
    return %arg0, %c0_i32 : i32, i32
  }
}

</mosaic_0001>

<llo_original>
// kernel: tpu_custom_call.1
$region0: #{tpu_custom_call.1}
  #allocation0 [shape = 'u32[]', space=smem, size = 0x4, offset = 0x4, fixed_abs, tag = 'smem constant byte address 0x4 - core index']
  #allocation1 [shape = 'u32[144,128]{1,0:T(1,128)}', space=vmem, size = 0x12000, scoped, tag = 'internal scratch']
  #allocation2 [shape = 'f32[128,128]{1,0:T(8,128)}', space=vmem, size = 0x10000, scoped, tag = 'scratch operand']
  #allocation3 [shape = 's32[1]{0}', space=sflag, size = 0x4, scoped, tag = 'scoped memory for tpu_custom_call.1']
  #allocation4 [shape = 'u8[2048]{0}', space=smem, size = 0x800, scoped, tag = 'prefetched SMEM operand 0']
  #allocation5 [shape = 'u8[512]{0}', space=smem, size = 0x200, scoped, tag = 'prefetched SMEM operand 1']
  %s0 = inlined_call_operand.hbm [shape: s32[3,3], index: 0, kind: input, shape index: {}]
  %s1 = inlined_call_operand.vmem [shape: s32[3], index: 1, kind: input, shape index: {}]
  %s2 = inlined_call_operand.hbm [shape: bf16[384,384], index: 2, kind: input, shape index: {}]
  %s3 = inlined_call_operand.hbm [shape: bf16[384,128], index: 3, kind: input, shape index: {}]
  %s4 = inlined_call_operand.hbm [shape: f32[128,128], index: 4, kind: input, shape index: {}]
  %s5 = inlined_call_operand.vmem [shape: f32[1,128], index: 5, kind: input, shape index: {}]
  %s6 = inlined_call_operand.hbm [shape: f32[128,128], index: 6, kind: input, shape index: {}]
  %s7 = inlined_call_operand.vmem [shape: f32[1,128], index: 7, kind: input, shape index: {}]
  %s8 = inlined_call_operand.hbm [shape: f32[384,128], index: 8, kind: output, shape index: {}]
  %s9 = sld [smem:[#allocation0]]
  $region85: #{tpu_custom_call.1} parent=0
    _
  %s11 = ssub.s32 1, %s9
  %s12 = scalar_select 0, %s11, %s9
  %14 = dma.hbm_to_smem %s0, 64, [#allocation4], [#allocation3]
  %s15 = sshll.u32 %s1, 4
  %s16 = int_to_ptr.vmem [resolvable:$true] %s15
  %18 = dma.vmem_to_smem %s16, 16, [#allocation5], [#allocation3]
  %19 = dma.done [#allocation3], 80
  %20 = sfence
  $region1: #{tpu_custom_call.1} parent=0
    #allocation6 [shape = 'u8[65536]{0}', space=vmem, size = 0x10000, scoped, tag = 'input window, operand 2']
    #allocation7 [shape = 's32[2]{0}', space=sflag, size = 0x8, scoped, tag = 'scoped memory for tpu_custom_call.1']
    #allocation8 [shape = 's32[2]{0}', space=sflag, size = 0x8, scoped, tag = 'scoped memory for tpu_custom_call.1']
    #allocation9 [shape = 'u8[65536]{0}', space=vmem, size = 0x10000, scoped, tag = 'input window, operand 3']
    #allocation10 [shape = 's32[2]{0}', space=sflag, size = 0x8, scoped, tag = 'scoped memory for tpu_custom_call.1']
    #allocation11 [shape = 'u8[65536]{0}', space=vmem, size = 0x10000, scoped, tag = 'input window, operand 4, single buffered']
    #allocation12 [shape = 'u8[65536]{0}', space=vmem, size = 0x10000, scoped, tag = 'input window, operand 6, single buffered']
    #allocation13 [shape = 's32[1]{0}', space=sflag, size = 0x4, scoped, tag = 'scoped memory for tpu_custom_call.1']
    #allocation14 [shape = 'u8[131072]{0}', space=vmem, size = 0x20000, scoped, tag = 'output window, operand 0']
    %21 = vsyncpa [#allocation7], 0
    %s22 = scalar_lea.sflag [#allocation7], 1
    %23 = vsyncpa %s22, 0
    %24 = vsyncpa [#allocation10], 0
    %s25 = scalar_lea.sflag [#allocation10], 1
    %26 = vsyncpa %s25, 0
    %27 = vsyncpa [#allocation13], 0
    %28 = vsyncpa [#allocation8], 0
    %s29 = scalar_lea.sflag [#allocation8], 1
    %30 = vsyncpa %s29, 0
    loop: start=0, step=1, limit=11
    $region2: #{tpu_custom_call.1} parent=1 // loop_pre_header
      _
    $region3: #{tpu_custom_call.1} parent=1 // loop_header
      %s32 = sphi 0, %s36
      %p33 = scmp.ge.s32.totalorder %s32, 11
      %s39 = sphi 0, %s51
      %s40 = sphi 0, %s47
      %s41 = sphi 0, %s39
      %s42 = sphi 0, %s40
      %s43 = sphi 0, %s41
      %s44 = sphi 0, %s42
      %s72 = sphi 0, %s74
      %s75 = sphi 0, %s72
      %s76 = sphi 0, %s75
      %s92 = sphi 0, %s76
      %s114 = sphi 0, %s116
      %s117 = sphi 0, %s114
      %s118 = sphi 0, %s117
      %s134 = sphi 0, %s118
      %s138 = sphi 0, %s138
      %s140 = sphi 0, %s138
      %s141 = sphi 0, %s140
      %s155 = sphi 0, %s141
      %s159 = sphi 0, %s159
      %s161 = sphi 0, %s159
      %s162 = sphi 0, %s161
      %s176 = sphi 0, %s162
      %s180 = sphi 0, %s180
      %s182 = sphi 0, %s180
      %s183 = sphi 0, %s182
      %s197 = sphi 0, %s183
      %s201 = sphi 0, %s201
      %s203 = sphi 0, %s201
      %s204 = sphi 0, %s203
      %s218 = sphi 0, %s204
      %s224 = sphi 0, %s226
      %s227 = sphi 0, %s224
      %s228 = sphi 0, %s227
      %s244 = sphi 0, %s228
    $region4: #{tpu_custom_call.1} parent=1 // loop_header_branch
      %35 = sbr.rel (%p33) target = $region8
    $region5: #{tpu_custom_call.1} parent=1 // loop_body
      %s37 = ssub.s32 %s32, 1
      %s38 = ssub.s32 %s32, 2
      %s45 = sadd.s32 1, %s40
      %p46 = scmp.ge.s32.totalorder %s45, 3
      %s47 = scalar_select %p46, 0, %s45
      %s48 = sadd.s32 1, %s39
      %s49 = scalar_select %p46, %s48, %s39
      %p50 = scmp.ge.s32.totalorder %s49, 3
      %s51 = scalar_select %p50, 0, %s49
      %s52 = sshra.s32 %s40, 7
      %s53 = sand.u32 %s40, 127
      %s54 = sadd.s32 %s52, %s39
      %s55 = smul.u32 %s54, 128
      %s56 = sshra.s32 %s40, 7
      %s57 = sand.u32 %s40, 127
      %s58 = sadd.s32 %s55, %s57
      %s59 = sld [smem:[#allocation4 + %s58]]
      %s60 = sshra.s32 %s47, 7
      %s61 = sand.u32 %s47, 127
      %s62 = sadd.s32 %s60, %s51
      %s63 = smul.u32 %s62, 128
      %s64 = sshra.s32 %s47, 7
      %s65 = sand.u32 %s47, 127
      %s66 = sadd.s32 %s63, %s65
      %s67 = sld [smem:[#allocation4 + %s66]]
      %s68 = ssub.s32 %s39, %s51
      %s69 = ssub.s32 %s59, %s67
      %s70 = sor.u32 %s68, %s69
      %p71 = scmp.eq.s32.totalorder %s70, 0
      %s73 = sadd.s32 %s72, 1
      %s74 = scalar_select %p71, %s72, %s73
      %p77 = pneg %p71
      %p78 = scmp.eq.s32.totalorder %s32, 8
      %p79 = por %p77, %p78
      %p80 = scmp.ne.s32.totalorder %s72, %s75
      %p81 = scmp.eq.s32.totalorder %s32, 0
      %p82 = por %p80, %p81
      %p83 = scmp.ne.s32.totalorder %s72, %s75
      %p84 = scmp.eq.s32.totalorder %s37, 8
      %p85 = por %p83, %p84
      %p86 = scmp.ne.s32.totalorder %s75, %s76
      %p87 = scmp.eq.s32.totalorder %s37, 0
      %p88 = por %p86, %p87
      %p89 = scmp.ne.s32.totalorder %s75, %s76
      %p90 = scmp.eq.s32.totalorder %s38, 8
      %p91 = por %p89, %p90
      %p93 = scmp.ne.s32.totalorder %s76, %s92
      %p94 = scmp.eq.s32.totalorder %s38, 0
      %p95 = por %p93, %p94
      %s96 = sshra.s32 %s40, 7
      %s97 = sand.u32 %s40, 127
      %s98 = sadd.s32 %s96, %s39
      %s99 = smul.u32 %s98, 128
      %s100 = sshra.s32 %s40, 7
      %s101 = sand.u32 %s40, 127
      %s102 = sadd.s32 %s99, %s101
      %s103 = sld [smem:[#allocation4 + %s102]]
      %s104 = sshra.s32 %s47, 7
      %s105 = sand.u32 %s47, 127
      %s106 = sadd.s32 %s104, %s51
      %s107 = smul.u32 %s106, 128
      %s108 = sshra.s32 %s47, 7
      %s109 = sand.u32 %s47, 127
      %s110 = sadd.s32 %s107, %s109
      %s111 = sld [smem:[#allocation4 + %s110]]
      %s112 = ssub.s32 %s103, %s111
      %p113 = scmp.eq.s32.totalorder %s112, 0
      %s115 = sadd.s32 %s114, 1
      %s116 = scalar_select %p113, %s114, %s115
      %p119 = pneg %p113
      %p120 = scmp.eq.s32.totalorder %s32, 8
      %p121 = por %p119, %p120
      %p122 = scmp.ne.s32.totalorder %s114, %s117
      %p123 = scmp.eq.s32.totalorder %s32, 0
      %p124 = por %p122, %p123
      %p125 = scmp.ne.s32.totalorder %s114, %s117
      %p126 = scmp.eq.s32.totalorder %s37, 8
      %p127 = por %p125, %p126
      %p128 = scmp.ne.s32.totalorder %s117, %s118
      %p129 = scmp.eq.s32.totalorder %s37, 0
      %p130 = por %p128, %p129
      %p131 = scmp.ne.s32.totalorder %s117, %s118
      %p132 = scmp.eq.s32.totalorder %s38, 8
      %p133 = por %p131, %p132
      %p135 = scmp.ne.s32.totalorder %s118, %s134
      %p136 = scmp.eq.s32.totalorder %s38, 0
      %p137 = por %p135, %p136
      %s139 = sadd.s32 %s138, 1
      %p142 = scmp.eq.s32.totalorder %s32, 8
      %p143 = scmp.ne.s32.totalorder %s138, %s140
      %p144 = scmp.eq.s32.totalorder %s32, 0
      %p145 = por %p143, %p144
      %p146 = scmp.ne.s32.totalorder %s138, %s140
      %p147 = scmp.eq.s32.totalorder %s37, 8
      %p148 = por %p146, %p147
      %p149 = scmp.ne.s32.totalorder %s140, %s141
      %p150 = scmp.eq.s32.totalorder %s37, 0
      %p151 = por %p149, %p150
      %p152 = scmp.ne.s32.totalorder %s140, %s141
      %p153 = scmp.eq.s32.totalorder %s38, 8
      %p154 = por %p152, %p153
      %p156 = scmp.ne.s32.totalorder %s141, %s155
      %p157 = scmp.eq.s32.totalorder %s38, 0
      %p158 = por %p156, %p157
      %s160 = sadd.s32 %s159, 1
      %p163 = scmp.eq.s32.totalorder %s32, 8
      %p164 = scmp.ne.s32.totalorder %s159, %s161
      %p165 = scmp.eq.s32.totalorder %s32, 0
      %p166 = por %p164, %p165
      %p167 = scmp.ne.s32.totalorder %s159, %s161
      %p168 = scmp.eq.s32.totalorder %s37, 8
      %p169 = por %p167, %p168
      %p170 = scmp.ne.s32.totalorder %s161, %s162
      %p171 = scmp.eq.s32.totalorder %s37, 0
      %p172 = por %p170, %p171
      %p173 = scmp.ne.s32.totalorder %s161, %s162
      %p174 = scmp.eq.s32.totalorder %s38, 8
      %p175 = por %p173, %p174
      %p177 = scmp.ne.s32.totalorder %s162, %s176
      %p178 = scmp.eq.s32.totalorder %s38, 0
      %p179 = por %p177, %p178
      %s181 = sadd.s32 %s180, 1
      %p184 = scmp.eq.s32.totalorder %s32, 8
      %p185 = scmp.ne.s32.totalorder %s180, %s182
      %p186 = scmp.eq.s32.totalorder %s32, 0
      %p187 = por %p185, %p186
      %p188 = scmp.ne.s32.totalorder %s180, %s182
      %p189 = scmp.eq.s32.totalorder %s37, 8
      %p190 = por %p188, %p189
      %p191 = scmp.ne.s32.totalorder %s182, %s183
      %p192 = scmp.eq.s32.totalorder %s37, 0
      %p193 = por %p191, %p192
      %p194 = scmp.ne.s32.totalorder %s182, %s183
      %p195 = scmp.eq.s32.totalorder %s38, 8
      %p196 = por %p194, %p195
      %p198 = scmp.ne.s32.totalorder %s183, %s197
      %p199 = scmp.eq.s32.totalorder %s38, 0
      %p200 = por %p198, %p199
      %s202 = sadd.s32 %s201, 1
      %p205 = scmp.eq.s32.totalorder %s32, 8
      %p206 = scmp.ne.s32.totalorder %s201, %s203
      %p207 = scmp.eq.s32.totalorder %s32, 0
      %p208 = por %p206, %p207
      %p209 = scmp.ne.s32.totalorder %s201, %s203
      %p210 = scmp.eq.s32.totalorder %s37, 8
      %p211 = por %p209, %p210
      %p212 = scmp.ne.s32.totalorder %s203, %s204
      %p213 = scmp.eq.s32.totalorder %s37, 0
      %p214 = por %p212, %p213
      %p215 = scmp.ne.s32.totalorder %s203, %s204
      %p216 = scmp.eq.s32.totalorder %s38, 8
      %p217 = por %p215, %p216
      %p219 = scmp.ne.s32.totalorder %s204, %s218
      %p220 = scmp.eq.s32.totalorder %s38, 0
      %p221 = por %p219, %p220
      %s222 = ssub.s32 %s39, %s51
      %p223 = scmp.eq.s32.totalorder %s222, 0
      %s225 = sadd.s32 %s224, 1
      %s226 = scalar_select %p223, %s224, %s225
      %p229 = pneg %p223
      %p230 = scmp.eq.s32.totalorder %s32, 8
      %p231 = por %p229, %p230
      %p232 = scmp.ne.s32.totalorder %s224, %s227
      %p233 = scmp.eq.s32.totalorder %s32, 0
      %p234 = por %p232, %p233
      %p235 = scmp.ne.s32.totalorder %s224, %s227
      %p236 = scmp.eq.s32.totalorder %s37, 8
      %p237 = por %p235, %p236
      %p238 = scmp.ne.s32.totalorder %s227, %s228
      %p239 = scmp.eq.s32.totalorder %s37, 0
      %p240 = por %p238, %p239
      %p241 = scmp.ne.s32.totalorder %s227, %s228
      %p242 = scmp.eq.s32.totalorder %s38, 8
      %p243 = por %p241, %p242
      %p245 = scmp.ne.s32.totalorder %s228, %s244
      %p246 = scmp.eq.s32.totalorder %s38, 0
      %p247 = por %p245, %p246
      %p248 = scmp.le.s32.totalorder 1, %s32
      %p249 = scmp.lt.s32.totalorder %s32, 10
      %p250 = pnand %p248, %p249
      %p251 = pneg %p250
      // Predicated region
      $region9: #{tpu_custom_call.1} parent=5 // pred_check
        _
      $region10: #{tpu_custom_call.1} parent=5 // pred_check_branch
        %253 = sbr.rel (%p250) target = $region12
      $region11: #{tpu_custom_call.1} parent=5 // pred_region
        %s254 = ssub.s32 %s32, 1
        // Predicated region
        $region13: #{tpu_custom_call.1} parent=11 // pred_check
          %p255 = pneg %p151
        $region14: #{tpu_custom_call.1} parent=11 // pred_check_branch
          %257 = sbr.rel (%p255) target = $region16
        $region15: #{tpu_custom_call.1} parent=11 // pred_region
          %s259 = ssub.s32 2048, 2048
          %260 = vsyncadd [#allocation10], %s259
          %s261 = sshll.u32 [#allocation11], 4
          %s262 = int_to_ptr.vmem [resolvable:$true] %s261
          %267 = dma.hbm_to_vmem [thread:$0]  %s4, 2048, %s262, [#allocation10], 128, 128, 8
        $region16: #{tpu_custom_call.1} parent=11 // pred_fallthru
          _
        // Predicated region
        $region17: #{tpu_custom_call.1} parent=11 // pred_check
          %p268 = pneg %p172
        $region18: #{tpu_custom_call.1} parent=11 // pred_check_branch
          %270 = sbr.rel (%p268) target = $region20
        $region19: #{tpu_custom_call.1} parent=11 // pred_region
          _
        $region20: #{tpu_custom_call.1} parent=11 // pred_fallthru
          _
        // Predicated region
        $region21: #{tpu_custom_call.1} parent=11 // pred_check
          %p271 = pneg %p193
        $region22: #{tpu_custom_call.1} parent=11 // pred_check_branch
          %273 = sbr.rel (%p271) target = $region24
        $region23: #{tpu_custom_call.1} parent=11 // pred_region
          %s275 = ssub.s32 2048, 2048
          %276 = vsyncadd [#allocation13], %s275
          %s277 = sshll.u32 [#allocation12], 4
          %s278 = int_to_ptr.vmem [resolvable:$true] %s277
          %283 = dma.hbm_to_vmem [thread:$0]  %s6, 2048, %s278, [#allocation13], 128, 128, 8
        $region24: #{tpu_custom_call.1} parent=11 // pred_fallthru
          _
        // Predicated region
        $region25: #{tpu_custom_call.1} parent=11 // pred_check
          %p284 = pneg %p214
        $region26: #{tpu_custom_call.1} parent=11 // pred_check_branch
          %286 = sbr.rel (%p284) target = $region28
        $region27: #{tpu_custom_call.1} parent=11 // pred_region
          _
        $region28: #{tpu_custom_call.1} parent=11 // pred_fallthru
          _
      $region12: #{tpu_custom_call.1} parent=5 // pred_fallthru
        _
      %p287 = scmp.lt.s32.totalorder %s32, 9
      // Predicated region
      $region29: #{tpu_custom_call.1} parent=5 // pred_check
        %p288 = pneg %p287
      $region30: #{tpu_custom_call.1} parent=5 // pred_check_branch
        %290 = sbr.rel (%p288) target = $region32
      $region31: #{tpu_custom_call.1} parent=5 // pred_region
        // Predicated region
        $region33: #{tpu_custom_call.1} parent=31 // pred_check
          %p291 = pneg %p82
        $region34: #{tpu_custom_call.1} parent=31 // pred_check_branch
          %293 = sbr.rel (%p291) target = $region36
        $region35: #{tpu_custom_call.1} parent=31 // pred_region
          %s294 = sand.u32 %s72, 1
          %s295 = scalar_lea.sflag [#allocation7], %s294
          %s296 = sand.u32 %s72, 1
          %s297 = smul.addr %s296, 64
          %s298 = scalar_lea.vmem [#allocation6], %s297
          %s299 = sshra.s32 %s40, 7
          %s300 = sand.u32 %s40, 127
          %s301 = sadd.s32 %s299, %s39
          %s302 = smul.u32 %s301, 128
          %s303 = sshra.s32 %s40, 7
          %s304 = sand.u32 %s40, 127
          %s305 = sadd.s32 %s302, %s304
          %s306 = sld [smem:[#allocation4 + %s305]]
          %s307 = smul.u32 16, %s39
          %s309 = ssub.s32 1024, 1024
          %310 = vsyncadd %s295, %s309
          %s311 = smul.addr %s307, 3
          %s312 = sadd.s32 %s306, %s311
          %s313 = smul.addr %s312, 64
          %s314 = scalar_lea.hbm %s2, %s313
          %s315 = sshll.u32 %s298, 4
          %s316 = int_to_ptr.vmem [resolvable:$true] %s315
          %321 = dma.hbm_to_vmem [thread:$0]  %s314, 1024, %s316, %s295, 192, 64, 4
        $region36: #{tpu_custom_call.1} parent=31 // pred_fallthru
          _
        // Predicated region
        $region37: #{tpu_custom_call.1} parent=31 // pred_check
          %p322 = pneg %p124
        $region38: #{tpu_custom_call.1} parent=31 // pred_check_branch
          %324 = sbr.rel (%p322) target = $region40
        $region39: #{tpu_custom_call.1} parent=31 // pred_region
          %s325 = sand.u32 %s32, 1
          %s326 = scalar_lea.sflag [#allocation10], %s325
          %s327 = sand.u32 %s114, 1
          %s328 = smul.addr %s327, 64
          %s329 = scalar_lea.vmem [#allocation9], %s328
          %s330 = sshra.s32 %s40, 7
          %s331 = sand.u32 %s40, 127
          %s332 = sadd.s32 %s330, %s39
          %s333 = smul.u32 %s332, 128
          %s334 = sshra.s32 %s40, 7
          %s335 = sand.u32 %s40, 127
          %s336 = sadd.s32 %s333, %s335
          %s337 = sld [smem:[#allocation4 + %s336]]
          %s338 = smul.u32 16, %s337
          %s340 = ssub.s32 1024, 1024
          %341 = vsyncadd %s326, %s340
          %s342 = smul.addr %s338, 64
          %s343 = scalar_lea.hbm %s3, %s342
          %s344 = sshll.u32 %s329, 4
          %s345 = int_to_ptr.vmem [resolvable:$true] %s344
          %350 = dma.hbm_to_vmem [thread:$0]  %s343, 1024, %s345, %s326, 64, 64, 4
        $region40: #{tpu_custom_call.1} parent=31 // pred_fallthru
          _
      $region32: #{tpu_custom_call.1} parent=5 // pred_fallthru
        _
      %p351 = scmp.le.s32.totalorder 1, %s32
      %p352 = scmp.lt.s32.totalorder %s32, 10
      %p353 = pnand %p351, %p352
      %p354 = pneg %p353
      // Predicated region
      $region41: #{tpu_custom_call.1} parent=5 // pred_check
        _
      $region42: #{tpu_custom_call.1} parent=5 // pred_check_branch
        %356 = sbr.rel (%p353) target = $region44
      $region43: #{tpu_custom_call.1} parent=5 // pred_region
        %s357 = ssub.s32 %s32, 1
        %s358 = sand.u32 %s75, 1
        %s359 = scalar_lea.sflag [#allocation7], %s358
        %s360 = sand.u32 %s75, 1
        %s361 = smul.addr %s360, 64
        %s362 = scalar_lea.vmem [#allocation6], %s361
        // Predicated region
        $region45: #{tpu_custom_call.1} parent=43 // pred_check
          %p363 = pneg %p88
        $region46: #{tpu_custom_call.1} parent=43 // pred_check_branch
          %365 = sbr.rel (%p363) target = $region48
        $region47: #{tpu_custom_call.1} parent=43 // pred_region
          %366 = dma.done %s359, 1024
        $region48: #{tpu_custom_call.1} parent=43 // pred_fallthru
          _
        %s367 = sand.u32 %s37, 1
        %s368 = scalar_lea.sflag [#allocation10], %s367
        %s369 = sand.u32 %s117, 1
        %s370 = smul.addr %s369, 64
        %s371 = scalar_lea.vmem [#allocation9], %s370
        // Predicated region
        $region49: #{tpu_custom_call.1} parent=43 // pred_check
          %p372 = pneg %p130
        $region50: #{tpu_custom_call.1} parent=43 // pred_check_branch
          %374 = sbr.rel (%p372) target = $region52
        $region51: #{tpu_custom_call.1} parent=43 // pred_region
          %375 = dma.done %s368, 1024
        $region52: #{tpu_custom_call.1} parent=43 // pred_fallthru
          _
        // Predicated region
        $region53: #{tpu_custom_call.1} parent=43 // pred_check
          %p376 = pneg %p151
        $region54: #{tpu_custom_call.1} parent=43 // pred_check_branch
          %378 = sbr.rel (%p376) target = $region56
        $region55: #{tpu_custom_call.1} parent=43 // pred_region
          %379 = dma.done [#allocation10], 2048
        $region56: #{tpu_custom_call.1} parent=43 // pred_fallthru
          _
        // Predicated region
        $region57: #{tpu_custom_call.1} parent=43 // pred_check
          %p380 = pneg %p193
        $region58: #{tpu_custom_call.1} parent=43 // pred_check_branch
          %382 = sbr.rel (%p380) target = $region60
        $region59: #{tpu_custom_call.1} parent=43 // pred_region
          %383 = dma.done [#allocation13], 2048
        $region60: #{tpu_custom_call.1} parent=43 // pred_fallthru
          _
        %s384 = sand.u32 %s75, 1
        %s385 = scalar_lea.sflag [#allocation7], %s384
        %s386 = sand.u32 %s75, 1
        %s387 = smul.addr %s386, 64
        %s388 = scalar_lea.vmem [#allocation6], %s387
        %p389 = pneg %p88
        %p390 = pneg %p85
        %s391 = sand.u32 %s37, 1
        %s392 = scalar_lea.sflag [#allocation10], %s391
        %s393 = sand.u32 %s117, 1
        %s394 = smul.addr %s393, 64
        %s395 = scalar_lea.vmem [#allocation9], %s394
        %p396 = pneg %p130
        %p397 = pneg %p127
        %p398 = pneg %p151
        %p399 = pneg %p148
        %p400 = pneg %p172
        %p401 = pneg %p169
        %p402 = pneg %p193
        %p403 = pneg %p190
        %p404 = pneg %p214
        %p405 = pneg %p211
        %p406 = pneg %p240
        %p407 = pneg %p237
        %s408 = sand.u32 %s227, 1
        %s409 = scalar_lea.sflag [#allocation8], %s408
        %s410 = sand.u32 %s227, 1
        %s411 = smul.addr %s410, 128
        %s412 = scalar_lea.vmem [#allocation14], %s411
        %s413 = sshra.s32 %s42, 7
        %s414 = sand.u32 %s42, 127
        %s415 = sadd.s32 %s413, %s41
        %s416 = smul.u32 %s415, 128
        %s417 = sshra.s32 %s42, 7
        %s418 = sand.u32 %s42, 127
        %s419 = sadd.s32 %s416, %s418
        %s420 = sld [smem:[#allocation4 + %s419]]
        %s421 = smul.u32 16, %s41
        %s422 = sshra.s32 %s42, 7
        %s423 = sand.u32 %s42, 127
        %s424 = sadd.s32 %s422, %s41
        %s425 = smul.u32 %s424, 128
        %s426 = sshra.s32 %s42, 7
        %s427 = sand.u32 %s42, 127
        %s428 = sadd.s32 %s425, %s427
        %s429 = sld [smem:[#allocation4 + %s428]]
        %s430 = smul.u32 16, %s429
        %s431 = smul.u32 16, %s41
        %p433 = scmp.eq.s32.totalorder %s42, 0
        // Predicated region
        $region61: #{tpu_custom_call.1} parent=43 // pred_check
          %p434 = pneg %p433
        $region62: #{tpu_custom_call.1} parent=43 // pred_check_branch
          %436 = sbr.rel (%p434) target = $region64
        $region63: #{tpu_custom_call.1} parent=43 // pred_region
          %437 = vst [vmem:[#allocation2] sm:$0xff] 0.0
          %438 = vst [vmem:[#allocation2 + $0x8] sm:$0xff] 0.0
          %439 = vst [vmem:[#allocation2 + $0x10] sm:$0xff] 0.0
          %440 = vst [vmem:[#allocation2 + $0x18] sm:$0xff] 0.0
          %441 = vst [vmem:[#allocation2 + $0x20] sm:$0xff] 0.0
          %442 = vst [vmem:[#allocation2 + $0x28] sm:$0xff] 0.0
          %443 = vst [vmem:[#allocation2 + $0x30] sm:$0xff] 0.0
          %444 = vst [vmem:[#allocation2 + $0x38] sm:$0xff] 0.0
          %445 = vst [vmem:[#allocation2 + $0x40] sm:$0xff] 0.0
          %446 = vst [vmem:[#allocation2 + $0x48] sm:$0xff] 0.0
          %447 = vst [vmem:[#allocation2 + $0x50] sm:$0xff] 0.0
          %448 = vst [vmem:[#allocation2 + $0x58] sm:$0xff] 0.0
          %449 = vst [vmem:[#allocation2 + $0x60] sm:$0xff] 0.0
          %450 = vst [vmem:[#allocation2 + $0x68] sm:$0xff] 0.0
          %451 = vst [vmem:[#allocation2 + $0x70] sm:$0xff] 0.0
          %452 = vst [vmem:[#allocation2 + $0x78] sm:$0xff] 0.0
        $region64: #{tpu_custom_call.1} parent=43 // pred_fallthru
          _
        %s453 = sld [smem:[#allocation5 + %s41]]
        %p454 = scmp.lt.s32.totalorder %s42, %s453
        // Predicated region
        $region65: #{tpu_custom_call.1} parent=43 // pred_check
          %p455 = pneg %p454
        $region66: #{tpu_custom_call.1} parent=43 // pred_check_branch
          %457 = sbr.rel (%p455) target = $region68
        $region67: #{tpu_custom_call.1} parent=43 // pred_region
          %v458 = vld [vmem:[#allocation2] sm:$0xff]
          %v459 = vld [vmem:[#allocation2 + $0x8] sm:$0xff]
          %v460 = vld [vmem:[#allocation2 + $0x10] sm:$0xff]
          %v461 = vld [vmem:[#allocation2 + $0x18] sm:$0xff]
          %v462 = vld [vmem:[#allocation2 + $0x20] sm:$0xff]
          %v463 = vld [vmem:[#allocation2 + $0x28] sm:$0xff]
          %v464 = vld [vmem:[#allocation2 + $0x30] sm:$0xff]
          %v465 = vld [vmem:[#allocation2 + $0x38] sm:$0xff]
          %v466 = vld [vmem:[#allocation2 + $0x40] sm:$0xff]
          %v467 = vld [vmem:[#allocation2 + $0x48] sm:$0xff]
          %v468 = vld [vmem:[#allocation2 + $0x50] sm:$0xff]
          %v469 = vld [vmem:[#allocation2 + $0x58] sm:$0xff]
          %v470 = vld [vmem:[#allocation2 + $0x60] sm:$0xff]
          %v471 = vld [vmem:[#allocation2 + $0x68] sm:$0xff]
          %v472 = vld [vmem:[#allocation2 + $0x70] sm:$0xff]
          %v473 = vld [vmem:[#allocation2 + $0x78] sm:$0xff]
          %v474 = vld [vmem:[%s362] sm:$0xf]
          %v475 = vld [vmem:[%s362 + $0x4] sm:$0xf]
          %v476 = vld [vmem:[%s362 + $0x8] sm:$0xf]
          %v477 = vld [vmem:[%s362 + $0xc] sm:$0xf]
          %v478 = vld [vmem:[%s362 + $0x10] sm:$0xf]
          %v479 = vld [vmem:[%s362 + $0x14] sm:$0xf]
          %v480 = vld [vmem:[%s362 + $0x18] sm:$0xf]
          %v481 = vld [vmem:[%s362 + $0x1c] sm:$0xf]
          %v482 = vld [vmem:[%s362 + $0x20] sm:$0xf]
          %v483 = vld [vmem:[%s362 + $0x24] sm:$0xf]
          %v484 = vld [vmem:[%s362 + $0x28] sm:$0xf]
          %v485 = vld [vmem:[%s362 + $0x2c] sm:$0xf]
          %v486 = vld [vmem:[%s362 + $0x30] sm:$0xf]
          %v487 = vld [vmem:[%s362 + $0x34] sm:$0xf]
          %v488 = vld [vmem:[%s362 + $0x38] sm:$0xf]
          %v489 = vld [vmem:[%s362 + $0x3c] sm:$0xf]
          %v490 = vld [vmem:[%s371] sm:$0xf]
          %v491 = vld [vmem:[%s371 + $0x4] sm:$0xf]
          %v492 = vld [vmem:[%s371 + $0x8] sm:$0xf]
          %v493 = vld [vmem:[%s371 + $0xc] sm:$0xf]
          %v494 = vld [vmem:[%s371 + $0x10] sm:$0xf]
          %v495 = vld [vmem:[%s371 + $0x14] sm:$0xf]
          %v496 = vld [vmem:[%s371 + $0x18] sm:$0xf]
          %v497 = vld [vmem:[%s371 + $0x1c] sm:$0xf]
          %v498 = vld [vmem:[%s371 + $0x20] sm:$0xf]
          %v499 = vld [vmem:[%s371 + $0x24] sm:$0xf]
          %v500 = vld [vmem:[%s371 + $0x28] sm:$0xf]
          %v501 = vld [vmem:[%s371 + $0x2c] sm:$0xf]
          %v502 = vld [vmem:[%s371 + $0x30] sm:$0xf]
          %v503 = vld [vmem:[%s371 + $0x34] sm:$0xf]
          %v504 = vld [vmem:[%s371 + $0x38] sm:$0xf]
          %v505 = vld [vmem:[%s371 + $0x3c] sm:$0xf]
          %v522 = vunpack.c.l.b16 %v474
          %v523 = vunpack.c.l.b16 %v475
          %v524 = vunpack.c.l.b16 %v476
          %v525 = vunpack.c.l.b16 %v477
          %v526 = vunpack.c.l.b16 %v478
          %v527 = vunpack.c.l.b16 %v479
          %v528 = vunpack.c.l.b16 %v480
          %v529 = vunpack.c.l.b16 %v481
          %v530 = vunpack.c.l.b16 %v482
          %v531 = vunpack.c.l.b16 %v483
          %v532 = vunpack.c.l.b16 %v484
          %v533 = vunpack.c.l.b16 %v485
          %v534 = vunpack.c.l.b16 %v486
          %v535 = vunpack.c.l.b16 %v487
          %v536 = vunpack.c.l.b16 %v488
          %v537 = vunpack.c.l.b16 %v489
          %v538 = vpack.c.b16 %v523, %v522
          %v539 = vpack.c.b16 %v525, %v524
          %v540 = vpack.c.b16 %v527, %v526
          %v541 = vpack.c.b16 %v529, %v528
          %v542 = vpack.c.b16 %v531, %v530
          %v543 = vpack.c.b16 %v533, %v532
          %v544 = vpack.c.b16 %v535, %v534
          %v545 = vpack.c.b16 %v537, %v536
          %v570 = vunpack.c.l.b16 %v490
          %v571 = vunpack.c.l.b16 %v491
          %v572 = vunpack.c.l.b16 %v492
          %v573 = vunpack.c.l.b16 %v493
          %v574 = vunpack.c.l.b16 %v494
          %v575 = vunpack.c.l.b16 %v495
          %v576 = vunpack.c.l.b16 %v496
          %v577 = vunpack.c.l.b16 %v497
          %v578 = vunpack.c.l.b16 %v498
          %v579 = vunpack.c.l.b16 %v499
          %v580 = vunpack.c.l.b16 %v500
          %v581 = vunpack.c.l.b16 %v501
          %v582 = vunpack.c.l.b16 %v502
          %v583 = vunpack.c.l.b16 %v503
          %v584 = vunpack.c.l.b16 %v504
          %v585 = vunpack.c.l.b16 %v505
          %v586 = vpack.c.b16 %v571, %v570
          %v587 = vpack.c.b16 %v573, %v572
          %v588 = vpack.c.b16 %v575, %v574
          %v589 = vpack.c.b16 %v577, %v576
          %v590 = vpack.c.b16 %v579, %v578
          %v591 = vpack.c.b16 %v581, %v580
          %v592 = vpack.c.b16 %v583, %v582
          %v593 = vpack.c.b16 %v585, %v584
          %602 = vmatprep.subr.bf16.mxu0 0
          %603 = vmatpush1.bf16.msra.mxu0 %v586
          %604 = vmatprep.subr.bf16.mxu0 0
          %605 = vmatpush1.bf16.msra.mxu0 %v587
          %606 = vmatprep.subr.bf16.mxu0 0
          %607 = vmatpush1.bf16.msra.mxu0 %v588
          %608 = vmatprep.subr.bf16.mxu0 0
          %609 = vmatpush1.bf16.msra.mxu0 %v589
          %610 = vmatprep.subr.bf16.mxu0 0
          %611 = vmatpush1.bf16.msra.mxu0 %v590
          %612 = vmatprep.subr.bf16.mxu0 0
          %613 = vmatpush1.bf16.msra.mxu0 %v591
          %614 = vmatprep.subr.bf16.mxu0 0
          %615 = vmatpush1.bf16.msra.mxu0 %v592
          %616 = vmatprep.subr.bf16.mxu0 0
          %617 = vmatpush1.bf16.msra.mxu0 %v593
          %618 = vmatprep.subr.bf16.mxu0 0
          %619 = vmatpush1.bf16.msra.mxu0 0
          %620 = vmatprep.subr.bf16.mxu0 0
          %621 = vmatpush1.bf16.msra.mxu0 0
          %622 = vmatprep.subr.bf16.mxu0 0
          %623 = vmatpush1.bf16.msra.mxu0 0
          %624 = vmatprep.subr.bf16.mxu0 0
          %625 = vmatpush1.bf16.msra.mxu0 0
          %626 = vmatprep.subr.bf16.mxu0 0
          %627 = vmatpush1.bf16.msra.mxu0 0
          %628 = vmatprep.subr.bf16.mxu0 0
          %629 = vmatpush1.bf16.msra.mxu0 0
          %630 = vmatprep.subr.bf16.mxu0 0
          %631 = vmatpush1.bf16.msra.mxu0 0
          %632 = vmatprep.subr.bf16.mxu0 0
          %633 = vmatpush1.bf16.msra.mxu0 0
          %634 = vmatprep.mubr.bf16.mxu0 0
          %635 = vmatmul.mubr.bf16.gmra.mrb[0].mxu0 %v538
          %v636 = vpop.f32.mrb[0].mxu0
          %v637 = vadd.f32 0.0, %v636
          %v638 = vpop.f32.mrb[0].mxu0
          %v639 = vpop.f32.mrb[0].mxu0
          %v640 = vadd.f32 0.0, %v639
          %v641 = vpop.f32.mrb[0].mxu0
          %642 = vmatprep.mubr.bf16.mxu0 0
          %643 = vmatmul.mubr.bf16.gmra.mrb[0].mxu0 %v539
          %v644 = vpop.f32.mrb[0].mxu0
          %v645 = vadd.f32 0.0, %v644
          %v646 = vpop.f32.mrb[0].mxu0
          %v647 = vpop.f32.mrb[0].mxu0
          %v648 = vadd.f32 0.0, %v647
          %v649 = vpop.f32.mrb[0].mxu0
          %650 = vmatprep.mubr.bf16.mxu0 0
          %651 = vmatmul.mubr.bf16.gmra.mrb[0].mxu0 %v540
          %v652 = vpop.f32.mrb[0].mxu0
          %v653 = vadd.f32 0.0, %v652
          %v654 = vpop.f32.mrb[0].mxu0
          %v655 = vpop.f32.mrb[0].mxu0
          %v656 = vadd.f32 0.0, %v655
          %v657 = vpop.f32.mrb[0].mxu0
          %658 = vmatprep.mubr.bf16.mxu0 0
          %659 = vmatmul.mubr.bf16.gmra.mrb[0].mxu0 %v541
          %v660 = vpop.f32.mrb[0].mxu0
          %v661 = vadd.f32 0.0, %v660
          %v662 = vpop.f32.mrb[0].mxu0
          %v663 = vpop.f32.mrb[0].mxu0
          %v664 = vadd.f32 0.0, %v663
          %v665 = vpop.f32.mrb[0].mxu0
          %666 = vmatprep.mubr.bf16.mxu0 0
          %667 = vmatmul.mubr.bf16.gmra.mrb[0].mxu0 %v542
          %v668 = vpop.f32.mrb[0].mxu0
          %v669 = vadd.f32 0.0, %v668
          %v670 = vpop.f32.mrb[0].mxu0
          %v671 = vpop.f32.mrb[0].mxu0
          %v672 = vadd.f32 0.0, %v671
          %v673 = vpop.f32.mrb[0].mxu0
          %674 = vmatprep.mubr.bf16.mxu0 0
          %675 = vmatmul.mubr.bf16.gmra.mrb[0].mxu0 %v543
          %v676 = vpop.f32.mrb[0].mxu0
          %v677 = vadd.f32 0.0, %v676
          %v678 = vpop.f32.mrb[0].mxu0
          %v679 = vpop.f32.mrb[0].mxu0
          %v680 = vadd.f32 0.0, %v679
          %v681 = vpop.f32.mrb[0].mxu0
          %682 = vmatprep.mubr.bf16.mxu0 0
          %683 = vmatmul.mubr.bf16.gmra.mrb[0].mxu0 %v544
          %v684 = vpop.f32.mrb[0].mxu0
          %v685 = vadd.f32 0.0, %v684
          %v686 = vpop.f32.mrb[0].mxu0
          %v687 = vpop.f32.mrb[0].mxu0
          %v688 = vadd.f32 0.0, %v687
          %v689 = vpop.f32.mrb[0].mxu0
          %690 = vmatprep.mubr.bf16.mxu0 0
          %691 = vmatmul.mubr.bf16.gmra.mrb[0].mxu0 %v545
          %v692 = vpop.f32.mrb[0].mxu0
          %v693 = vadd.f32 0.0, %v692
          %v694 = vpop.f32.mrb[0].mxu0
          %v695 = vpop.f32.mrb[0].mxu0
          %v696 = vadd.f32 0.0, %v695
          %v697 = vpop.f32.mrb[0].mxu0
          %698 = vdwg.mxu0
          %v699 = vadd.f32 %v458, %v637
          %v700 = vadd.f32 %v459, %v640
          %v701 = vadd.f32 %v460, %v645
          %v702 = vadd.f32 %v461, %v648
          %v703 = vadd.f32 %v462, %v653
          %v704 = vadd.f32 %v463, %v656
          %v705 = vadd.f32 %v464, %v661
          %v706 = vadd.f32 %v465, %v664
          %v707 = vadd.f32 %v466, %v669
          %v708 = vadd.f32 %v467, %v672
          %v709 = vadd.f32 %v468, %v677
          %v710 = vadd.f32 %v469, %v680
          %v711 = vadd.f32 %v470, %v685
          %v712 = vadd.f32 %v471, %v688
          %v713 = vadd.f32 %v472, %v693
          %v714 = vadd.f32 %v473, %v696
          %715 = vst [vmem:[#allocation2] sm:$0xff] %v699
          %716 = vst [vmem:[#allocation2 + $0x8] sm:$0xff] %v700
          %717 = vst [vmem:[#allocation2 + $0x10] sm:$0xff] %v701
          %718 = vst [vmem:[#allocation2 + $0x18] sm:$0xff] %v702
          %719 = vst [vmem:[#allocation2 + $0x20] sm:$0xff] %v703
          %720 = vst [vmem:[#allocation2 + $0x28] sm:$0xff] %v704
          %721 = vst [vmem:[#allocation2 + $0x30] sm:$0xff] %v705
          %722 = vst [vmem:[#allocation2 + $0x38] sm:$0xff] %v706
          %723 = vst [vmem:[#allocation2 + $0x40] sm:$0xff] %v707
          %724 = vst [vmem:[#allocation2 + $0x48] sm:$0xff] %v708
          %725 = vst [vmem:[#allocation2 + $0x50] sm:$0xff] %v709
          %726 = vst [vmem:[#allocation2 + $0x58] sm:$0xff] %v710
          %727 = vst [vmem:[#allocation2 + $0x60] sm:$0xff] %v711
          %728 = vst [vmem:[#allocation2 + $0x68] sm:$0xff] %v712
          %729 = vst [vmem:[#allocation2 + $0x70] sm:$0xff] %v713
          %730 = vst [vmem:[#allocation2 + $0x78] sm:$0xff] %v714
        $region68: #{tpu_custom_call.1} parent=43 // pred_fallthru
          _
        %p731 = scmp.eq.s32.totalorder %s42, 2
        // Predicated region
        $region69: #{tpu_custom_call.1} parent=43 // pred_check
          %p732 = pneg %p731
        $region70: #{tpu_custom_call.1} parent=43 // pred_check_branch
          %734 = sbr.rel (%p732) target = $region72
        $region71: #{tpu_custom_call.1} parent=43 // pred_region
          %v735 = vld [vmem:[#allocation2] sm:$0xff]
          %v736 = vld [vmem:[#allocation2 + $0x8] sm:$0xff]
          %v737 = vld [vmem:[#allocation2 + $0x10] sm:$0xff]
          %v738 = vld [vmem:[#allocation2 + $0x18] sm:$0xff]
          %v739 = vld [vmem:[#allocation2 + $0x20] sm:$0xff]
          %v740 = vld [vmem:[#allocation2 + $0x28] sm:$0xff]
          %v741 = vld [vmem:[#allocation2 + $0x30] sm:$0xff]
          %v742 = vld [vmem:[#allocation2 + $0x38] sm:$0xff]
          %v743 = vld [vmem:[#allocation2 + $0x40] sm:$0xff]
          %v744 = vld [vmem:[#allocation2 + $0x48] sm:$0xff]
          %v745 = vld [vmem:[#allocation2 + $0x50] sm:$0xff]
          %v746 = vld [vmem:[#allocation2 + $0x58] sm:$0xff]
          %v747 = vld [vmem:[#allocation2 + $0x60] sm:$0xff]
          %v748 = vld [vmem:[#allocation2 + $0x68] sm:$0xff]
          %v749 = vld [vmem:[#allocation2 + $0x70] sm:$0xff]
          %v750 = vld [vmem:[#allocation2 + $0x78] sm:$0xff]
          %v751 = vld [vmem:[#allocation11] sm:$0xff]
          %v752 = vld [vmem:[#allocation11 + $0x8] sm:$0xff]
          %v753 = vld [vmem:[#allocation11 + $0x10] sm:$0xff]
          %v754 = vld [vmem:[#allocation11 + $0x18] sm:$0xff]
          %v755 = vld [vmem:[#allocation11 + $0x20] sm:$0xff]
          %v756 = vld [vmem:[#allocation11 + $0x28] sm:$0xff]
          %v757 = vld [vmem:[#allocation11 + $0x30] sm:$0xff]
          %v758 = vld [vmem:[#allocation11 + $0x38] sm:$0xff]
          %v759 = vld [vmem:[#allocation11 + $0x40] sm:$0xff]
          %v760 = vld [vmem:[#allocation11 + $0x48] sm:$0xff]
          %v761 = vld [vmem:[#allocation11 + $0x50] sm:$0xff]
          %v762 = vld [vmem:[#allocation11 + $0x58] sm:$0xff]
          %v763 = vld [vmem:[#allocation11 + $0x60] sm:$0xff]
          %v764 = vld [vmem:[#allocation11 + $0x68] sm:$0xff]
          %v765 = vld [vmem:[#allocation11 + $0x70] sm:$0xff]
          %v766 = vld [vmem:[#allocation11 + $0x78] sm:$0xff]
          %v767 = vld [vmem:[%s5] sm:$0x1]
          %v769 = vlaneseq
          %v770 = vshrl.u32 %v769, 7
          %v771 = vsub.s32 0, %v770
          %v772 = vrot.slane %v767, %v771
          %774 = vmatprep.subr.mxu0 0.0
          %775 = vmatpush1.msra.mxu0 %v751
          %776 = vmatprep.subr.mxu0 0.0
          %777 = vmatpush1.msra.mxu0 %v752
          %778 = vmatprep.subr.mxu0 0.0
          %779 = vmatpush1.msra.mxu0 %v753
          %780 = vmatprep.subr.mxu0 0.0
          %781 = vmatpush1.msra.mxu0 %v754
          %782 = vmatprep.subr.mxu0 0.0
          %783 = vmatpush1.msra.mxu0 %v755
          %784 = vmatprep.subr.mxu0 0.0
          %785 = vmatpush1.msra.mxu0 %v756
          %786 = vmatprep.subr.mxu0 0.0
          %787 = vmatpush1.msra.mxu0 %v757
          %788 = vmatprep.subr.mxu0 0.0
          %789 = vmatpush1.msra.mxu0 %v758
          %790 = vmatprep.subr.mxu0 0.0
          %791 = vmatpush1.msra.mxu0 %v759
          %792 = vmatprep.subr.mxu0 0.0
          %793 = vmatpush1.msra.mxu0 %v760
          %794 = vmatprep.subr.mxu0 0.0
          %795 = vmatpush1.msra.mxu0 %v761
          %796 = vmatprep.subr.mxu0 0.0
          %797 = vmatpush1.msra.mxu0 %v762
          %798 = vmatprep.subr.mxu0 0.0
          %799 = vmatpush1.msra.mxu0 %v763
          %800 = vmatprep.subr.mxu0 0.0
          %801 = vmatpush1.msra.mxu0 %v764
          %802 = vmatprep.subr.mxu0 0.0
          %803 = vmatpush1.msra.mxu0 %v765
          %804 = vmatprep.subr.mxu0 0.0
          %805 = vmatpush1.msra.mxu0 %v766
          %806 = vmatprep.subr.mxu0 0.0
          %807 = vmatpush1.msra.mxu0 0.0
          %808 = vmatprep.subr.mxu0 0.0
          %809 = vmatpush1.msra.mxu0 0.0
          %810 = vmatprep.subr.mxu0 0.0
          %811 = vmatpush1.msra.mxu0 0.0
          %812 = vmatprep.subr.mxu0 0.0
          %813 = vmatpush1.msra.mxu0 0.0
          %814 = vmatprep.subr.mxu0 0.0
          %815 = vmatpush1.msra.mxu0 0.0
          %816 = vmatprep.subr.mxu0 0.0
          %817 = vmatpush1.msra.mxu0 0.0
          %818 = vmatprep.subr.mxu0 0.0
          %819 = vmatpush1.msra.mxu0 0.0
          %820 = vmatprep.subr.mxu0 0.0
          %821 = vmatpush1.msra.mxu0 0.0
          %822 = vmatprep.subr.mxu0 0.0
          %823 = vmatpush1.msra.mxu0 0.0
          %824 = vmatprep.subr.mxu0 0.0
          %825 = vmatpush1.msra.mxu0 0.0
          %826 = vmatprep.subr.mxu0 0.0
          %827 = vmatpush1.msra.mxu0 0.0
          %828 = vmatprep.subr.mxu0 0.0
          %829 = vmatpush1.msra.mxu0 0.0
          %830 = vmatprep.subr.mxu0 0.0
          %831 = vmatpush1.msra.mxu0 0.0
          %832 = vmatprep.subr.mxu0 0.0
          %833 = vmatpush1.msra.mxu0 0.0
          %834 = vmatprep.subr.mxu0 0.0
          %835 = vmatpush1.msra.mxu0 0.0
          %836 = vmatprep.subr.mxu0 0.0
          %837 = vmatpush1.msra.mxu0 0.0
          %838 = vmatprep.mubr.f32.mxu0 0.0
          %839 = vmatmul.mubr.f32.gmra.mrb[0].mxu0 %v735
          %v840 = vpop.f32.mrb[0].mxu0
          %v841 = vadd.f32 %v772, %v840
          %v842 = vpop.f32.mrb[0].mxu0
          %843 = vmatprep.mubr.f32.mxu0 0.0
          %844 = vmatmul.mubr.f32.gmra.mrb[0].mxu0 %v736
          %v845 = vpop.f32.mrb[0].mxu0
          %v846 = vadd.f32 %v772, %v845
          %v847 = vpop.f32.mrb[0].mxu0
          %848 = vmatprep.mubr.f32.mxu0 0.0
          %849 = vmatmul.mubr.f32.gmra.mrb[0].mxu0 %v737
          %v850 = vpop.f32.mrb[0].mxu0
          %v851 = vadd.f32 %v772, %v850
          %v852 = vpop.f32.mrb[0].mxu0
          %853 = vmatprep.mubr.f32.mxu0 0.0
          %854 = vmatmul.mubr.f32.gmra.mrb[0].mxu0 %v738
          %v855 = vpop.f32.mrb[0].mxu0
          %v856 = vadd.f32 %v772, %v855
          %v857 = vpop.f32.mrb[0].mxu0
          %858 = vmatprep.mubr.f32.mxu0 0.0
          %859 = vmatmul.mubr.f32.gmra.mrb[0].mxu0 %v739
          %v860 = vpop.f32.mrb[0].mxu0
          %v861 = vadd.f32 %v772, %v860
          %v862 = vpop.f32.mrb[0].mxu0
          %863 = vmatprep.mubr.f32.mxu0 0.0
          %864 = vmatmul.mubr.f32.gmra.mrb[0].mxu0 %v740
          %v865 = vpop.f32.mrb[0].mxu0
          %v866 = vadd.f32 %v772, %v865
          %v867 = vpop.f32.mrb[0].mxu0
          %868 = vmatprep.mubr.f32.mxu0 0.0
          %869 = vmatmul.mubr.f32.gmra.mrb[0].mxu0 %v741
          %v870 = vpop.f32.mrb[0].mxu0
          %v871 = vadd.f32 %v772, %v870
          %v872 = vpop.f32.mrb[0].mxu0
          %873 = vmatprep.mubr.f32.mxu0 0.0
          %874 = vmatmul.mubr.f32.gmra.mrb[0].mxu0 %v742
          %v875 = vpop.f32.mrb[0].mxu0
          %v876 = vadd.f32 %v772, %v875
          %v877 = vpop.f32.mrb[0].mxu0
          %878 = vmatprep.mubr.f32.mxu0 0.0
          %879 = vmatmul.mubr.f32.gmra.mrb[0].mxu0 %v743
          %v880 = vpop.f32.mrb[0].mxu0
          %v881 = vadd.f32 %v772, %v880
          %v882 = vpop.f32.mrb[0].mxu0
          %883 = vmatprep.mubr.f32.mxu0 0.0
          %884 = vmatmul.mubr.f32.gmra.mrb[0].mxu0 %v744
          %v885 = vpop.f32.mrb[0].mxu0
          %v886 = vadd.f32 %v772, %v885
          %v887 = vpop.f32.mrb[0].mxu0
          %888 = vmatprep.mubr.f32.mxu0 0.0
          %889 = vmatmul.mubr.f32.gmra.mrb[0].mxu0 %v745
          %v890 = vpop.f32.mrb[0].mxu0
          %v891 = vadd.f32 %v772, %v890
          %v892 = vpop.f32.mrb[0].mxu0
          %893 = vmatprep.mubr.f32.mxu0 0.0
          %894 = vmatmul.mubr.f32.gmra.mrb[0].mxu0 %v746
          %v895 = vpop.f32.mrb[0].mxu0
          %v896 = vadd.f32 %v772, %v895
          %v897 = vpop.f32.mrb[0].mxu0
          %898 = vmatprep.mubr.f32.mxu0 0.0
          %899 = vmatmul.mubr.f32.gmra.mrb[0].mxu0 %v747
          %v900 = vpop.f32.mrb[0].mxu0
          %v901 = vadd.f32 %v772, %v900
          %v902 = vpop.f32.mrb[0].mxu0
          %903 = vmatprep.mubr.f32.mxu0 0.0
          %904 = vmatmul.mubr.f32.gmra.mrb[0].mxu0 %v748
          %v905 = vpop.f32.mrb[0].mxu0
          %v906 = vadd.f32 %v772, %v905
          %v907 = vpop.f32.mrb[0].mxu0
          %908 = vmatprep.mubr.f32.mxu0 0.0
          %909 = vmatmul.mubr.f32.gmra.mrb[0].mxu0 %v749
          %v910 = vpop.f32.mrb[0].mxu0
          %v911 = vadd.f32 %v772, %v910
          %v912 = vpop.f32.mrb[0].mxu0
          %913 = vmatprep.mubr.f32.mxu0 0.0
          %914 = vmatmul.mubr.f32.gmra.mrb[0].mxu0 %v750
          %v915 = vpop.f32.mrb[0].mxu0
          %v916 = vadd.f32 %v772, %v915
          %v917 = vpop.f32.mrb[0].mxu0
          %918 = vdwg.mxu0
          %v919 = vmax.f32 %v841, 0.0
          %v920 = vmax.f32 %v846, 0.0
          %v921 = vmax.f32 %v851, 0.0
          %v922 = vmax.f32 %v856, 0.0
          %v923 = vmax.f32 %v861, 0.0
          %v924 = vmax.f32 %v866, 0.0
          %v925 = vmax.f32 %v871, 0.0
          %v926 = vmax.f32 %v876, 0.0
          %v927 = vmax.f32 %v881, 0.0
          %v928 = vmax.f32 %v886, 0.0
          %v929 = vmax.f32 %v891, 0.0
          %v930 = vmax.f32 %v896, 0.0
          %v931 = vmax.f32 %v901, 0.0
          %v932 = vmax.f32 %v906, 0.0
          %v933 = vmax.f32 %v911, 0.0
          %v934 = vmax.f32 %v916, 0.0
          %v935 = vld [vmem:[#allocation12] sm:$0xff]
          %v936 = vld [vmem:[#allocation12 + $0x8] sm:$0xff]
          %v937 = vld [vmem:[#allocation12 + $0x10] sm:$0xff]
          %v938 = vld [vmem:[#allocation12 + $0x18] sm:$0xff]
          %v939 = vld [vmem:[#allocation12 + $0x20] sm:$0xff]
          %v940 = vld [vmem:[#allocation12 + $0x28] sm:$0xff]
          %v941 = vld [vmem:[#allocation12 + $0x30] sm:$0xff]
          %v942 = vld [vmem:[#allocation12 + $0x38] sm:$0xff]
          %v943 = vld [vmem:[#allocation12 + $0x40] sm:$0xff]
          %v944 = vld [vmem:[#allocation12 + $0x48] sm:$0xff]
          %v945 = vld [vmem:[#allocation12 + $0x50] sm:$0xff]
          %v946 = vld [vmem:[#allocation12 + $0x58] sm:$0xff]
          %v947 = vld [vmem:[#allocation12 + $0x60] sm:$0xff]
          %v948 = vld [vmem:[#allocation12 + $0x68] sm:$0xff]
          %v949 = vld [vmem:[#allocation12 + $0x70] sm:$0xff]
          %v950 = vld [vmem:[#allocation12 + $0x78] sm:$0xff]
          %v951 = vld [vmem:[%s7] sm:$0x1]
          %v953 = vlaneseq
          %v954 = vshrl.u32 %v953, 7
          %v955 = vsub.s32 0, %v954
          %v956 = vrot.slane %v951, %v955
          %958 = vmatprep.subr.mxu0 0.0
          %959 = vmatpush1.msra.mxu0 %v935
          %960 = vmatprep.subr.mxu0 0.0
          %961 = vmatpush1.msra.mxu0 %v936
          %962 = vmatprep.subr.mxu0 0.0
          %963 = vmatpush1.msra.mxu0 %v937
          %964 = vmatprep.subr.mxu0 0.0
          %965 = vmatpush1.msra.mxu0 %v938
          %966 = vmatprep.subr.mxu0 0.0
          %967 = vmatpush1.msra.mxu0 %v939
          %968 = vmatprep.subr.mxu0 0.0
          %969 = vmatpush1.msra.mxu0 %v940
          %970 = vmatprep.subr.mxu0 0.0
          %971 = vmatpush1.msra.mxu0 %v941
          %972 = vmatprep.subr.mxu0 0.0
          %973 = vmatpush1.msra.mxu0 %v942
          %974 = vmatprep.subr.mxu0 0.0
          %975 = vmatpush1.msra.mxu0 %v943
          %976 = vmatprep.subr.mxu0 0.0
          %977 = vmatpush1.msra.mxu0 %v944
          %978 = vmatprep.subr.mxu0 0.0
          %979 = vmatpush1.msra.mxu0 %v945
          %980 = vmatprep.subr.mxu0 0.0
          %981 = vmatpush1.msra.mxu0 %v946
          %982 = vmatprep.subr.mxu0 0.0
          %983 = vmatpush1.msra.mxu0 %v947
          %984 = vmatprep.subr.mxu0 0.0
          %985 = vmatpush1.msra.mxu0 %v948
          %986 = vmatprep.subr.mxu0 0.0
          %987 = vmatpush1.msra.mxu0 %v949
          %988 = vmatprep.subr.mxu0 0.0
          %989 = vmatpush1.msra.mxu0 %v950
          %990 = vmatprep.subr.mxu0 0.0
          %991 = vmatpush1.msra.mxu0 0.0
          %992 = vmatprep.subr.mxu0 0.0
          %993 = vmatpush1.msra.mxu0 0.0
          %994 = vmatprep.subr.mxu0 0.0
          %995 = vmatpush1.msra.mxu0 0.0
          %996 = vmatprep.subr.mxu0 0.0
          %997 = vmatpush1.msra.mxu0 0.0
          %998 = vmatprep.subr.mxu0 0.0
          %999 = vmatpush1.msra.mxu0 0.0
          %1000 = vmatprep.subr.mxu0 0.0
          %1001 = vmatpush1.msra.mxu0 0.0
          %1002 = vmatprep.subr.mxu0 0.0
          %1003 = vmatpush1.msra.mxu0 0.0
          %1004 = vmatprep.subr.mxu0 0.0
          %1005 = vmatpush1.msra.mxu0 0.0
          %1006 = vmatprep.subr.mxu0 0.0
          %1007 = vmatpush1.msra.mxu0 0.0
          %1008 = vmatprep.subr.mxu0 0.0
          %1009 = vmatpush1.msra.mxu0 0.0
          %1010 = vmatprep.subr.mxu0 0.0
          %1011 = vmatpush1.msra.mxu0 0.0
          %1012 = vmatprep.subr.mxu0 0.0
          %1013 = vmatpush1.msra.mxu0 0.0
          %1014 = vmatprep.subr.mxu0 0.0
          %1015 = vmatpush1.msra.mxu0 0.0
          %1016 = vmatprep.subr.mxu0 0.0
          %1017 = vmatpush1.msra.mxu0 0.0
          %1018 = vmatprep.subr.mxu0 0.0
          %1019 = vmatpush1.msra.mxu0 0.0
          %1020 = vmatprep.subr.mxu0 0.0
          %1021 = vmatpush1.msra.mxu0 0.0
          %1022 = vmatprep.mubr.f32.mxu0 0.0
          %1023 = vmatmul.mubr.f32.gmra.mrb[0].mxu0 %v919
          %v1024 = vpop.f32.mrb[0].mxu0
          %v1025 = vadd.f32 %v956, %v1024
          %v1026 = vpop.f32.mrb[0].mxu0
          %1027 = vmatprep.mubr.f32.mxu0 0.0
          %1028 = vmatmul.mubr.f32.gmra.mrb[0].mxu0 %v920
          %v1029 = vpop.f32.mrb[0].mxu0
          %v1030 = vadd.f32 %v956, %v1029
          %v1031 = vpop.f32.mrb[0].mxu0
          %1032 = vmatprep.mubr.f32.mxu0 0.0
          %1033 = vmatmul.mubr.f32.gmra.mrb[0].mxu0 %v921
          %v1034 = vpop.f32.mrb[0].mxu0
          %v1035 = vadd.f32 %v956, %v1034
          %v1036 = vpop.f32.mrb[0].mxu0
          %1037 = vmatprep.mubr.f32.mxu0 0.0
          %1038 = vmatmul.mubr.f32.gmra.mrb[0].mxu0 %v922
          %v1039 = vpop.f32.mrb[0].mxu0
          %v1040 = vadd.f32 %v956, %v1039
          %v1041 = vpop.f32.mrb[0].mxu0
          %1042 = vmatprep.mubr.f32.mxu0 0.0
          %1043 = vmatmul.mubr.f32.gmra.mrb[0].mxu0 %v923
          %v1044 = vpop.f32.mrb[0].mxu0
          %v1045 = vadd.f32 %v956, %v1044
          %v1046 = vpop.f32.mrb[0].mxu0
          %1047 = vmatprep.mubr.f32.mxu0 0.0
          %1048 = vmatmul.mubr.f32.gmra.mrb[0].mxu0 %v924
          %v1049 = vpop.f32.mrb[0].mxu0
          %v1050 = vadd.f32 %v956, %v1049
          %v1051 = vpop.f32.mrb[0].mxu0
          %1052 = vmatprep.mubr.f32.mxu0 0.0
          %1053 = vmatmul.mubr.f32.gmra.mrb[0].mxu0 %v925
          %v1054 = vpop.f32.mrb[0].mxu0
          %v1055 = vadd.f32 %v956, %v1054
          %v1056 = vpop.f32.mrb[0].mxu0
          %1057 = vmatprep.mubr.f32.mxu0 0.0
          %1058 = vmatmul.mubr.f32.gmra.mrb[0].mxu0 %v926
          %v1059 = vpop.f32.mrb[0].mxu0
          %v1060 = vadd.f32 %v956, %v1059
          %v1061 = vpop.f32.mrb[0].mxu0
          %1062 = vmatprep.mubr.f32.mxu0 0.0
          %1063 = vmatmul.mubr.f32.gmra.mrb[0].mxu0 %v927
          %v1064 = vpop.f32.mrb[0].mxu0
          %v1065 = vadd.f32 %v956, %v1064
          %v1066 = vpop.f32.mrb[0].mxu0
          %1067 = vmatprep.mubr.f32.mxu0 0.0
          %1068 = vmatmul.mubr.f32.gmra.mrb[0].mxu0 %v928
          %v1069 = vpop.f32.mrb[0].mxu0
          %v1070 = vadd.f32 %v956, %v1069
          %v1071 = vpop.f32.mrb[0].mxu0
          %1072 = vmatprep.mubr.f32.mxu0 0.0
          %1073 = vmatmul.mubr.f32.gmra.mrb[0].mxu0 %v929
          %v1074 = vpop.f32.mrb[0].mxu0
          %v1075 = vadd.f32 %v956, %v1074
          %v1076 = vpop.f32.mrb[0].mxu0
          %1077 = vmatprep.mubr.f32.mxu0 0.0
          %1078 = vmatmul.mubr.f32.gmra.mrb[0].mxu0 %v930
          %v1079 = vpop.f32.mrb[0].mxu0
          %v1080 = vadd.f32 %v956, %v1079
          %v1081 = vpop.f32.mrb[0].mxu0
          %1082 = vmatprep.mubr.f32.mxu0 0.0
          %1083 = vmatmul.mubr.f32.gmra.mrb[0].mxu0 %v931
          %v1084 = vpop.f32.mrb[0].mxu0
          %v1085 = vadd.f32 %v956, %v1084
          %v1086 = vpop.f32.mrb[0].mxu0
          %1087 = vmatprep.mubr.f32.mxu0 0.0
          %1088 = vmatmul.mubr.f32.gmra.mrb[0].mxu0 %v932
          %v1089 = vpop.f32.mrb[0].mxu0
          %v1090 = vadd.f32 %v956, %v1089
          %v1091 = vpop.f32.mrb[0].mxu0
          %1092 = vmatprep.mubr.f32.mxu0 0.0
          %1093 = vmatmul.mubr.f32.gmra.mrb[0].mxu0 %v933
          %v1094 = vpop.f32.mrb[0].mxu0
          %v1095 = vadd.f32 %v956, %v1094
          %v1096 = vpop.f32.mrb[0].mxu0
          %1097 = vmatprep.mubr.f32.mxu0 0.0
          %1098 = vmatmul.mubr.f32.gmra.mrb[0].mxu0 %v934
          %v1099 = vpop.f32.mrb[0].mxu0
          %v1100 = vadd.f32 %v956, %v1099
          %v1101 = vpop.f32.mrb[0].mxu0
          %1102 = vdwg.mxu0
          %1103 = vst [vmem:[%s412] sm:$0xff] %v1025
          %1104 = vst [vmem:[%s412 + $0x8] sm:$0xff] %v1030
          %1105 = vst [vmem:[%s412 + $0x10] sm:$0xff] %v1035
          %1106 = vst [vmem:[%s412 + $0x18] sm:$0xff] %v1040
          %1107 = vst [vmem:[%s412 + $0x20] sm:$0xff] %v1045
          %1108 = vst [vmem:[%s412 + $0x28] sm:$0xff] %v1050
          %1109 = vst [vmem:[%s412 + $0x30] sm:$0xff] %v1055
          %1110 = vst [vmem:[%s412 + $0x38] sm:$0xff] %v1060
          %1111 = vst [vmem:[%s412 + $0x40] sm:$0xff] %v1065
          %1112 = vst [vmem:[%s412 + $0x48] sm:$0xff] %v1070
          %1113 = vst [vmem:[%s412 + $0x50] sm:$0xff] %v1075
          %1114 = vst [vmem:[%s412 + $0x58] sm:$0xff] %v1080
          %1115 = vst [vmem:[%s412 + $0x60] sm:$0xff] %v1085
          %1116 = vst [vmem:[%s412 + $0x68] sm:$0xff] %v1090
          %1117 = vst [vmem:[%s412 + $0x70] sm:$0xff] %v1095
          %1118 = vst [vmem:[%s412 + $0x78] sm:$0xff] %v1100
        $region72: #{tpu_custom_call.1} parent=43 // pred_fallthru
          _
        %s1119 = sand.u32 %s227, 1
        %s1120 = scalar_lea.sflag [#allocation8], %s1119
        %s1121 = sand.u32 %s227, 1
        %s1122 = smul.addr %s1121, 128
        %s1123 = scalar_lea.vmem [#allocation14], %s1122
        // Predicated region
        $region73: #{tpu_custom_call.1} parent=43 // pred_check
          %p1124 = pneg %p237
        $region74: #{tpu_custom_call.1} parent=43 // pred_check_branch
          %1126 = sbr.rel (%p1124) target = $region76
        $region75: #{tpu_custom_call.1} parent=43 // pred_region
          %s1127 = smul.u32 16, %s41
          %s1129 = ssub.s32 2048, 2048
          %1130 = vsyncadd %s1120, %s1129
          %s1131 = smul.addr %s1127, 128
          %s1132 = scalar_lea.hbm %s8, %s1131
          %s1133 = sshll.u32 %s1123, 4
          %s1134 = int_to_ptr.vmem [resolvable:$true] %s1133
          %1139 = dma.vmem_to_hbm [thread:$0]  %s1134, 2048, %s1132, %s1120, 128, 128, 8
        $region76: #{tpu_custom_call.1} parent=43 // pred_fallthru
          _
      $region44: #{tpu_custom_call.1} parent=5 // pred_fallthru
        _
      %p1140 = scmp.le.s32.totalorder 2, %s32
      // Predicated region
      $region77: #{tpu_custom_call.1} parent=5 // pred_check
        %p1141 = pneg %p1140
      $region78: #{tpu_custom_call.1} parent=5 // pred_check_branch
        %1143 = sbr.rel (%p1141) target = $region80
      $region79: #{tpu_custom_call.1} parent=5 // pred_region
        %s1144 = ssub.s32 %s32, 2
        // Predicated region
        $region81: #{tpu_custom_call.1} parent=79 // pred_check
          %p1145 = pneg %p243
        $region82: #{tpu_custom_call.1} parent=79 // pred_check_branch
          %1147 = sbr.rel (%p1145) target = $region84
        $region83: #{tpu_custom_call.1} parent=79 // pred_region
          %s1148 = sand.u32 %s228, 1
          %s1149 = scalar_lea.sflag [#allocation8], %s1148
          %s1150 = sand.u32 %s228, 1
          %s1151 = smul.addr %s1150, 128
          %s1152 = scalar_lea.vmem [#allocation14], %s1151
          %1153 = dma.done %s1149, 2048
        $region84: #{tpu_custom_call.1} parent=79 // pred_fallthru
          _
      $region80: #{tpu_custom_call.1} parent=5 // pred_fallthru
        _
    $region6: #{tpu_custom_call.1} parent=1 // loop_footer
      %s36 = sadd.s32 1, %s32
    $region7: #{tpu_custom_call.1} parent=1 // loop_footer_branch
      %31 = sbr.rel target = $region3
    $region8: #{tpu_custom_call.1} parent=1 // loop_exit
      _
    %1154 = vsyncpa [#allocation7], 1
    %s1155 = scalar_lea.sflag [#allocation7], 1
    %1156 = vsyncpa %s1155, 1
    %1157 = vsyncpa [#allocation10], 1
    %s1158 = scalar_lea.sflag [#allocation10], 1
    %1159 = vsyncpa %s1158, 1
    %1160 = vsyncpa [#allocation13], 1
    %1161 = vsyncpa [#allocation8], 1
    %s1162 = scalar_lea.sflag [#allocation8], 1
    %1163 = vsyncpa %s1162, 1

</llo_original>
